<compile_context>
chip_gen: v6e
topology: v6e:2x2x1
jax: 0.10.0
libtpu: 0.0.40
codegen_flags: <defaults>
</compile_context>

<pallas_src>
import jax
import jax.numpy as jnp
from jax import lax
from jax.experimental import pallas as pl
from jax.experimental.pallas import tpu as pltpu

_BN_EPS = 1e-5
_OUT_PAD = 128  # lane-dense padded output width (true output dim is 25)


def _bn_elu(h, gamma, beta):
    """Training-mode BatchNorm1d (biased batch stats) in affine form, then ELU."""
    mean = jnp.mean(h, axis=0, keepdims=True)
    c = h - mean
    var = jnp.mean(c * c, axis=0, keepdims=True)
    scale = gamma * lax.rsqrt(var + _BN_EPS)   # [1, d_hid] row; EUP work not re-broadcast
    h = c * scale + beta
    return jnp.where(h > 0, h, jnp.exp(h) - 1.0)   # ELU, alpha = 1


def predictor_kernel(x_ref, w1_ref, w23_ref, vec_ref, out_ref):
    dh = w23_ref.shape[0]          # padded hidden width (multiple of 128)
    out_pad = out_ref.shape[-1]

    # Stacked small per-feature vectors: [g1, beta1, g2, beta2, b3] (padded rows).
    vecs = vec_ref[...]
    g1, be1 = vecs[0:1, :dh], vecs[1:2, :dh]
    g2, be2 = vecs[2:3, :dh], vecs[3:4, :dh]
    b3 = vecs[4:5, :out_pad]

    x = x_ref[...]

    # linear1 (bias intentionally dropped: dead before training-mode BN).
    # Only this matmul may run in bf16 (w1_dtype); everything else stays f32.
    h = jnp.dot(x.astype(w1_ref.dtype), w1_ref[...],
                preferred_element_type=jnp.float32)
    h = _bn_elu(h, g1, be1)

    # linear2 (bias dropped, same reason).  Static lane-aligned slice of w23.
    h = jnp.dot(h, w23_ref[:, :dh], preferred_element_type=jnp.float32)
    h = _bn_elu(h, g2, be2)

    # linear3 (real bias, padded to lane-dense width).
    y = jnp.dot(h, w23_ref[:, dh:], preferred_element_type=jnp.float32) + b3
    out_ref[...] = y.astype(out_ref.dtype)


def _vmem_cap_bytes():
    try:
        cap = pltpu.get_tpu_info().vmem_capacity_bytes
    except Exception:
        cap = 128 << 20
    return int(cap * 3 // 4)  # leave headroom for Mosaic scratch / double buffers


def predictor_forward(x, params, *, w1_dtype=jnp.float32):
    """Forward pass.

    x: [B, d_in] (one BN batch) or [G, B, d_in] (G independent BN batches,
       each normalized with its own batch statistics).
    Returns [B, 25] or [G, B, 25] float32.
    """
    squeeze = x.ndim == 2
    if squeeze:
        x = x[None]
    G, B, d_in = x.shape

    d_hid = params["w1"].shape[1]
    out_dim = params["w3"].shape[1]
    d_hid_pad = ((d_hid + 127) // 128) * 128
    out_pad = max(_OUT_PAD, ((out_dim + 127) // 128) * 128)
    vec_w = max(d_hid_pad, out_pad)

    f32 = jnp.float32
    # w1: the dominant DMA; optionally bf16.  Zero-padded hidden columns.
    w1 = jnp.zeros((d_in, d_hid_pad), f32).at[:, :d_hid].set(
        params["w1"].astype(f32)).astype(w1_dtype)
    # w2 and w3 concatenated along columns -> one DMA; kept f32.
    w2p = jnp.zeros((d_hid_pad, d_hid_pad), f32).at[:d_hid, :d_hid].set(
        params["w2"].astype(f32))
    w3p = jnp.zeros((d_hid_pad, out_pad), f32).at[:d_hid, :out_dim].set(
        params["w3"].astype(f32))
    w23 = jnp.concatenate([w2p, w3p], axis=1)

    def pad_row(v, width):
        v = jnp.asarray(v, f32).reshape(1, -1)
        return jnp.pad(v, ((0, 0), (0, width - v.shape[1])))

    # One consolidated DMA for all tiny per-feature vectors (b1/b2 omitted:
    # cancelled by training-mode BN).  Padded to 8 rows for clean (8,128) tiles.
    vecs = jnp.concatenate(
        [
            pad_row(params["g1"], vec_w),
            pad_row(params["be1"], vec_w),
            pad_row(params["g2"], vec_w),
            pad_row(params["be2"], vec_w),
            pad_row(params["b3"], vec_w),
            jnp.zeros((3, vec_w), f32),
        ],
        axis=0,
    )  # [8, vec_w]

    w1_bytes = w1.size * jnp.dtype(w1_dtype).itemsize
    weight_bytes = w1_bytes + w23.size * 4 + vecs.size * 4
    blk_bytes = B * d_in * 4 + B * out_pad * 4
    vmem_need = weight_bytes + 4 * blk_bytes + (2 << 20)
    vmem_limit = int(min(max(vmem_need, 8 << 20), _vmem_cap_bytes()))

    flops = 2 * G * B * (d_in * d_hid_pad + d_hid_pad * d_hid_pad + d_hid_pad * out_pad)
    transcendentals = G * (2 * B * d_hid_pad + 2 * d_hid_pad)
    bytes_accessed = G * blk_bytes + weight_bytes

    out_padded = pl.pallas_call(
        predictor_kernel,
        out_shape=jax.ShapeDtypeStruct((G, B, out_pad), jnp.float32),
        grid=(G,),
        in_specs=[
            pl.BlockSpec((None, B, d_in), lambda g: (g, 0, 0)),          # per-group x
            pl.BlockSpec((d_in, d_hid_pad), lambda g: (0, 0)),           # resident w1
            pl.BlockSpec((d_hid_pad, d_hid_pad + out_pad), lambda g: (0, 0)),  # resident w2|w3
            pl.BlockSpec((8, vec_w), lambda g: (0, 0)),                  # resident vecs
        ],
        out_specs=pl.BlockSpec((None, B, out_pad), lambda g: (g, 0, 0)),
        compiler_params=pltpu.CompilerParams(
            dimension_semantics=("parallel",),
            vmem_limit_bytes=vmem_limit,
        ),
        cost_estimate=pl.CostEstimate(
            flops=flops,
            transcendentals=transcendentals,
            bytes_accessed=bytes_accessed,
        ),
    )(x, w1, w23, vecs)

    out = out_padded[:, :, :out_dim]
    return out[0] if squeeze else out


def init_params(key, n_heads):
    """Deterministic synthetic parameters matching the PyTorch module's shapes."""
    d_in = n_heads * 256
    d_hid = n_heads * 64
    d_out = 25

    keys = jax.random.split(key, 8)

    def linear(kw, kb, fan_in, fan_out):
        bound = 1.0 / jnp.sqrt(fan_in)
        w = jax.random.uniform(kw, (fan_in, fan_out), jnp.float32, -bound, bound)
        b = jax.random.uniform(kb, (1, fan_out), jnp.float32, -bound, bound)
        return w, b

    w1, b1 = linear(keys[0], keys[1], d_in, d_hid)
    w2, b2 = linear(keys[2], keys[3], d_hid, d_hid)
    w3, b3 = linear(keys[4], keys[5], d_hid, d_out)

    g1 = 1.0 + 0.1 * jax.random.normal(keys[6], (1, d_hid), jnp.float32)
    be1 = 0.1 * jax.random.normal(keys[7], (1, d_hid), jnp.float32)
    g2 = jnp.ones((1, d_hid), jnp.float32)
    be2 = jnp.zeros((1, d_hid), jnp.float32)

    return {
        "w1": w1, "b1": b1, "g1": g1, "be1": be1,
        "w2": w2, "b2": b2, "g2": g2, "be2": be2,
        "w3": w3, "b3": b3,
    }


def predictor_reference(x, params):
    """Pure-JAX mirror of the PyTorch forward (training-mode BN, biases included)."""
    def bn(h, g, b):
        m = jnp.mean(h, axis=0, keepdims=True)
        v = jnp.mean((h - m) ** 2, axis=0, keepdims=True)
        return (h - m) * lax.rsqrt(v + _BN_EPS) * g + b

    def elu(h):
        return jnp.where(h > 0, h, jnp.expm1(h))

    h = x @ params["w1"] + params["b1"]
    h = elu(bn(h, params["g1"], params["be1"]))
    h = h @ params["w2"] + params["b2"]
    h = elu(bn(h, params["g2"], params["be2"]))
    return h @ params["w3"] + params["b3"]


if __name__ == "__main__":
    key = jax.random.PRNGKey(0)
    k_x, k_g, k_p, k_p1 = jax.random.split(key, 4)

    # --- n_heads = 2: d_in = 512, d_hid = 128, out = 25 -------------------
    n_heads, batch, groups = 2, 8, 4
    params = init_params(k_p, n_heads)

    # Single BN batch (matches the PyTorch module's forward signature).
    x = jax.random.normal(k_x, (batch, n_heads * 256), jnp.float32)
    ref = predictor_reference(x, params)
    out = jax.block_until_ready(predictor_forward(x, params))
    assert out.shape == (batch, 25), out.shape
    assert jnp.allclose(out, ref, atol=1e-4, rtol=1e-4), float(
        jnp.max(jnp.abs(out - ref)))

    # G independent BN batches through one launch (grid amortization).
    xg = jax.random.normal(k_g, (groups, batch, n_heads * 256), jnp.float32)
    refg = jax.vmap(lambda xi: predictor_reference(xi, params))(xg)
    outg = jax.block_until_ready(predictor_forward(xg, params))
    assert outg.shape == (groups, batch, 25), outg.shape
    assert jnp.allclose(outg, refg, atol=1e-4, rtol=1e-4), float(
        jnp.max(jnp.abs(outg - refg)))

    # bf16 only on w1 (the dominant DMA); looser tolerance on layer-1 rounding.
    out_bf16 = jax.block_until_ready(
        predictor_forward(x, params, w1_dtype=jnp.bfloat16))
    assert out_bf16.shape == (batch, 25), out_bf16.shape
    assert jnp.allclose(out_bf16, ref, atol=1e-1, rtol=1e-1), float(
        jnp.max(jnp.abs(out_bf16 - ref)))

    # --- n_heads = 1 (odd): d_hid = 64 exercises the lane-pad-to-128 path --
    params1 = init_params(k_p1, 1)
    x1 = jax.random.normal(k_x, (8, 256), jnp.float32)
    ref1 = predictor_reference(x1, params1)
    out1 = jax.block_until_ready(predictor_forward(x1, params1))
    assert out1.shape == (8, 25), out1.shape
    assert jnp.allclose(out1, ref1, atol=1e-4, rtol=1e-4), float(
        jnp.max(jnp.abs(out1 - ref1)))

    print("KERNEL_OK")
</pallas_src>

<mosaic_0001>
module attributes {stable_mosaic.version = 11 : i64} {
  func.func @predictor_kernel(%arg0: i32, %arg1: memref<1x8x512xf32, #tpu.memory_space<vmem>>, %arg2: memref<512x128xf32, #tpu.memory_space<vmem>>, %arg3: memref<128x256xf32, #tpu.memory_space<vmem>>, %arg4: memref<8x128xf32, #tpu.memory_space<vmem>>, %arg5: memref<1x8x128xf32, #tpu.memory_space<vmem>>) attributes {dimension_semantics = [#tpu.dimension_semantics<parallel>], iteration_bounds = array<i64: 1>, scalar_prefetch = 0 : i64, scratch_operands = 0 : i64, tpu.core_type = #tpu.core_type<tc>, window_params = [{transform_indices = @transform_0, window_bounds = array<i64: 1, 8, 512>}, {pipeline_mode = #tpu.pipeline_mode<synchronous>, transform_indices = @transform_1, window_bounds = array<i64: 512, 128>}, {pipeline_mode = #tpu.pipeline_mode<synchronous>, transform_indices = @transform_2, window_bounds = array<i64: 128, 256>}, {pipeline_mode = #tpu.pipeline_mode<synchronous>, transform_indices = @transform_3, window_bounds = array<i64: 8, 128>}, {transform_indices = @transform_4, window_bounds = array<i64: 1, 8, 128>}]} {
    %c0 = arith.constant 0 : index
    %c0_0 = arith.constant 0 : index
    %0 = vector.load %arg4[%c0, %c0_0] : memref<8x128xf32, #tpu.memory_space<vmem>>, vector<8x128xf32>
    %1 = vector.extract_strided_slice %0 {offsets = [0, 0], sizes = [1, 128], strides = [1, 1]} : vector<8x128xf32> to vector<1x128xf32>
    %2 = vector.extract_strided_slice %0 {offsets = [1, 0], sizes = [1, 128], strides = [1, 1]} : vector<8x128xf32> to vector<1x128xf32>
    %3 = vector.extract_strided_slice %0 {offsets = [2, 0], sizes = [1, 128], strides = [1, 1]} : vector<8x128xf32> to vector<1x128xf32>
    %4 = vector.extract_strided_slice %0 {offsets = [3, 0], sizes = [1, 128], strides = [1, 1]} : vector<8x128xf32> to vector<1x128xf32>
    %5 = vector.extract_strided_slice %0 {offsets = [4, 0], sizes = [1, 128], strides = [1, 1]} : vector<8x128xf32> to vector<1x128xf32>
    %c0_1 = arith.constant 0 : index
    %c0_2 = arith.constant 0 : index
    %c0_3 = arith.constant 0 : index
    %6 = vector.load %arg1[%c0_1, %c0_2, %c0_3] : memref<1x8x512xf32, #tpu.memory_space<vmem>>, vector<1x8x512xf32>
    %7 = vector.shape_cast %6 : vector<1x8x512xf32> to vector<8x512xf32>
    %c0_4 = arith.constant 0 : index
    %c0_5 = arith.constant 0 : index
    %8 = vector.load %arg2[%c0_4, %c0_5] : memref<512x128xf32, #tpu.memory_space<vmem>>, vector<512x128xf32>
    %cst = arith.constant dense<0.000000e+00> : vector<8x128xf32>
    %9 = tpu.matmul %7, %8, %cst {dimension_numbers = #tpu.dot_dimension_numbers<[1], [0], [0], [1], [0, 0, 1, 1], [], []>} : vector<8x512xf32>, vector<512x128xf32>, vector<8x128xf32> -> vector<8x128xf32>
    %cst_6 = arith.constant dense<0.000000e+00> : vector<128xf32>
    %10 = vector.multi_reduction <add>, %9, %cst_6 [0] : vector<8x128xf32> to vector<128xf32>
    %11 = vector.shape_cast %10 : vector<128xf32> to vector<1x128xf32>
    %cst_7 = arith.constant 8.000000e+00 : f32
    %12 = vector.broadcast %cst_7 : f32 to vector<1x128xf32>
    %13 = arith.divf %11, %12 : vector<1x128xf32>
    %14 = vector.broadcast %13 : vector<1x128xf32> to vector<8x128xf32>
    %15 = arith.subf %9, %14 : vector<8x128xf32>
    %16 = arith.mulf %15, %15 : vector<8x128xf32>
    %cst_8 = arith.constant dense<0.000000e+00> : vector<128xf32>
    %17 = vector.multi_reduction <add>, %16, %cst_8 [0] : vector<8x128xf32> to vector<128xf32>
    %18 = vector.shape_cast %17 : vector<128xf32> to vector<1x128xf32>
    %cst_9 = arith.constant 8.000000e+00 : f32
    %19 = vector.broadcast %cst_9 : f32 to vector<1x128xf32>
    %20 = arith.divf %18, %19 : vector<1x128xf32>
    %cst_10 = arith.constant 9.99999974E-6 : f32
    %21 = vector.broadcast %cst_10 : f32 to vector<1x128xf32>
    %22 = arith.addf %20, %21 : vector<1x128xf32>
    %23 = math.rsqrt %22 : vector<1x128xf32>
    %24 = arith.mulf %1, %23 : vector<1x128xf32>
    %25 = vector.broadcast %24 : vector<1x128xf32> to vector<8x128xf32>
    %26 = arith.mulf %15, %25 : vector<8x128xf32>
    %27 = vector.broadcast %2 : vector<1x128xf32> to vector<8x128xf32>
    %28 = arith.addf %26, %27 : vector<8x128xf32>
    %cst_11 = arith.constant 0.000000e+00 : f32
    %29 = vector.broadcast %cst_11 : f32 to vector<8x128xf32>
    %30 = arith.cmpf ogt, %28, %29 : vector<8x128xf32>
    %31 = math.exp %28 : vector<8x128xf32>
    %cst_12 = arith.constant 1.000000e+00 : f32
    %32 = vector.broadcast %cst_12 : f32 to vector<8x128xf32>
    %33 = arith.subf %31, %32 : vector<8x128xf32>
    %34 = arith.select %30, %28, %33 : vector<8x128xi1>, vector<8x128xf32>
    %c0_13 = arith.constant 0 : index
    %c0_14 = arith.constant 0 : index
    %35 = vector.load %arg3[%c0_13, %c0_14] : memref<128x256xf32, #tpu.memory_space<vmem>>, vector<128x128xf32>
    %cst_15 = arith.constant dense<0.000000e+00> : vector<8x128xf32>
    %36 = tpu.matmul %34, %35, %cst_15 {dimension_numbers = #tpu.dot_dimension_numbers<[1], [0], [0], [1], [0, 0, 1, 1], [], []>} : vector<8x128xf32>, vector<128x128xf32>, vector<8x128xf32> -> vector<8x128xf32>
    %cst_16 = arith.constant dense<0.000000e+00> : vector<128xf32>
    %37 = vector.multi_reduction <add>, %36, %cst_16 [0] : vector<8x128xf32> to vector<128xf32>
    %38 = vector.shape_cast %37 : vector<128xf32> to vector<1x128xf32>
    %cst_17 = arith.constant 8.000000e+00 : f32
    %39 = vector.broadcast %cst_17 : f32 to vector<1x128xf32>
    %40 = arith.divf %38, %39 : vector<1x128xf32>
    %41 = vector.broadcast %40 : vector<1x128xf32> to vector<8x128xf32>
    %42 = arith.subf %36, %41 : vector<8x128xf32>
    %43 = arith.mulf %42, %42 : vector<8x128xf32>
    %cst_18 = arith.constant dense<0.000000e+00> : vector<128xf32>
    %44 = vector.multi_reduction <add>, %43, %cst_18 [0] : vector<8x128xf32> to vector<128xf32>
    %45 = vector.shape_cast %44 : vector<128xf32> to vector<1x128xf32>
    %cst_19 = arith.constant 8.000000e+00 : f32
    %46 = vector.broadcast %cst_19 : f32 to vector<1x128xf32>
    %47 = arith.divf %45, %46 : vector<1x128xf32>
    %cst_20 = arith.constant 9.99999974E-6 : f32
    %48 = vector.broadcast %cst_20 : f32 to vector<1x128xf32>
    %49 = arith.addf %47, %48 : vector<1x128xf32>
    %50 = math.rsqrt %49 : vector<1x128xf32>
    %51 = arith.mulf %3, %50 : vector<1x128xf32>
    %52 = vector.broadcast %51 : vector<1x128xf32> to vector<8x128xf32>
    %53 = arith.mulf %42, %52 : vector<8x128xf32>
    %54 = vector.broadcast %4 : vector<1x128xf32> to vector<8x128xf32>
    %55 = arith.addf %53, %54 : vector<8x128xf32>
    %cst_21 = arith.constant 0.000000e+00 : f32
    %56 = vector.broadcast %cst_21 : f32 to vector<8x128xf32>
    %57 = arith.cmpf ogt, %55, %56 : vector<8x128xf32>
    %58 = math.exp %55 : vector<8x128xf32>
    %cst_22 = arith.constant 1.000000e+00 : f32
    %59 = vector.broadcast %cst_22 : f32 to vector<8x128xf32>
    %60 = arith.subf %58, %59 : vector<8x128xf32>
    %61 = arith.select %57, %55, %60 : vector<8x128xi1>, vector<8x128xf32>
    %c0_23 = arith.constant 0 : index
    %c128 = arith.constant 128 : index
    %62 = vector.load %arg3[%c0_23, %c128] : memref<128x256xf32, #tpu.memory_space<vmem>>, vector<128x128xf32>
    %cst_24 = arith.constant dense<0.000000e+00> : vector<8x128xf32>
    %63 = tpu.matmul %61, %62, %cst_24 {dimension_numbers = #tpu.dot_dimension_numbers<[1], [0], [0], [1], [0, 0, 1, 1], [], []>} : vector<8x128xf32>, vector<128x128xf32>, vector<8x128xf32> -> vector<8x128xf32>
    %64 = vector.broadcast %5 : vector<1x128xf32> to vector<8x128xf32>
    %65 = arith.addf %63, %64 : vector<8x128xf32>
    %c0_25 = arith.constant 0 : index
    %c0_26 = arith.constant 0 : index
    %c0_27 = arith.constant 0 : index
    %66 = vector.load %arg5[%c0_25, %c0_26, %c0_27] : memref<1x8x128xf32, #tpu.memory_space<vmem>>, vector<1x8x128xf32>
    %67 = vector.shape_cast %66 : vector<1x8x128xf32> to vector<8x128xf32>
    %68 = vector.shape_cast %65 : vector<8x128xf32> to vector<1x8x128xf32>
    tpu.vector_store %arg5[%c0_25, %c0_26, %c0_27], %68 {strides = array<i32>} : memref<1x8x128xf32, #tpu.memory_space<vmem>>, vector<1x8x128xf32>,
    return
  }
  func.func @transform_0(%arg0: i32) -> (i32, i32, i32) {
    %c0_i32 = arith.constant 0 : i32
    %c0_i32_0 = arith.constant 0 : i32
    %c0_i32_1 = arith.constant 0 : i32
    return %arg0, %c0_i32, %c0_i32_0 : i32, i32, i32
  }
  func.func @transform_1(%arg0: i32) -> (i32, i32) {
    %c0_i32 = arith.constant 0 : i32
    %c0_i32_0 = arith.constant 0 : i32
    %c0_i32_1 = arith.constant 0 : i32
    return %c0_i32, %c0_i32_0 : i32, i32
  }
  func.func @transform_2(%arg0: i32) -> (i32, i32) {
    %c0_i32 = arith.constant 0 : i32
    %c0_i32_0 = arith.constant 0 : i32
    %c0_i32_1 = arith.constant 0 : i32
    return %c0_i32, %c0_i32_0 : i32, i32
  }
  func.func @transform_3(%arg0: i32) -> (i32, i32) {
    %c0_i32 = arith.constant 0 : i32
    %c0_i32_0 = arith.constant 0 : i32
    %c0_i32_1 = arith.constant 0 : i32
    return %c0_i32, %c0_i32_0 : i32, i32
  }
  func.func @transform_4(%arg0: i32) -> (i32, i32, i32) {
    %c0_i32 = arith.constant 0 : i32
    %c0_i32_0 = arith.constant 0 : i32
    %c0_i32_1 = arith.constant 0 : i32
    return %arg0, %c0_i32, %c0_i32_0 : i32, i32, i32
  }
}

</mosaic_0001>

<llo_original>
// kernel: tpu_custom_call.1
$region0: #{tpu_custom_call.1}
  #allocation0 [shape = 'u32[]', space=smem, size = 0x4, offset = 0x4, fixed_abs, tag = 'smem constant byte address 0x4 - core index']
  #allocation1 [shape = 'u32[144,128]{1,0:T(1,128)}', space=vmem, size = 0x12000, scoped, tag = 'internal scratch']
  %s0 = inlined_call_operand.hbm [shape: f32[1,8,512], index: 0, kind: input, shape index: {}]
  %s1 = inlined_call_operand.hbm [shape: f32[512,128], index: 1, kind: input, shape index: {}]
  %s2 = inlined_call_operand.hbm [shape: f32[128,256], index: 2, kind: input, shape index: {}]
  %s3 = inlined_call_operand.hbm [shape: f32[8,128], index: 3, kind: input, shape index: {}]
  %s4 = inlined_call_operand.hbm [shape: f32[1,8,128], index: 4, kind: output, shape index: {}]
  %s5 = sld [smem:[#allocation0]]
  $region42: #{tpu_custom_call.1} parent=0
    _
  %s7 = ssub.s32 1, %s5
  %s8 = scalar_select 0, %s7, %s5
  $region1: #{tpu_custom_call.1} parent=0
    #allocation2 [shape = 'u8[16384]{0}', space=vmem, size = 0x4000, scoped, tag = 'input window, operand 0, single buffered']
    #allocation3 [shape = 's32[1]{0}', space=sflag, size = 0x4, scoped, tag = 'scoped memory for tpu_custom_call.1']
    #allocation4 [shape = 's32[1]{0}', space=sflag, size = 0x4, scoped, tag = 'scoped memory for tpu_custom_call.1']
    #allocation5 [shape = 'u8[262144]{0}', space=vmem, size = 0x40000, scoped, tag = 'input window, operand 1, single buffered']
    #allocation6 [shape = 's32[1]{0}', space=sflag, size = 0x4, scoped, tag = 'scoped memory for tpu_custom_call.1']
    #allocation7 [shape = 'u8[131072]{0}', space=vmem, size = 0x20000, scoped, tag = 'input window, operand 2, single buffered']
    #allocation8 [shape = 'u8[4096]{0}', space=vmem, size = 0x1000, scoped, tag = 'input window, operand 3, single buffered']
    #allocation9 [shape = 's32[1]{0}', space=sflag, size = 0x4, scoped, tag = 'scoped memory for tpu_custom_call.1']
    #allocation10 [shape = 'u8[4096]{0}', space=vmem, size = 0x1000, scoped, tag = 'output window, operand 0, single buffered']
    %9 = vsyncpa [#allocation3], 0
    %10 = vsyncpa [#allocation6], 0
    %11 = vsyncpa [#allocation9], 0
    %12 = vsyncpa [#allocation4], 0
    // Predicated region
    $region2: #{tpu_custom_call.1} parent=1 // pred_check
      _
    $region3: #{tpu_custom_call.1} parent=1 // pred_check_branch
      %14 = sbr.rel (0) target = $region5
    $region4: #{tpu_custom_call.1} parent=1 // pred_region
      %s16 = ssub.s32 512, 512
      %17 = vsyncadd [#allocation3], %s16
      %s19 = sshll.u32 [#allocation2], 4
      %s20 = int_to_ptr.vmem [resolvable:$true] %s19
      %22 = dma.hbm_to_vmem [thread:$0]  %s0, 512, %s20, [#allocation3]
    $region5: #{tpu_custom_call.1} parent=1 // pred_fallthru
      _
    // Predicated region
    $region6: #{tpu_custom_call.1} parent=1 // pred_check
      _
    $region7: #{tpu_custom_call.1} parent=1 // pred_check_branch
      %24 = sbr.rel (0) target = $region9
    $region8: #{tpu_custom_call.1} parent=1 // pred_region
      %s26 = ssub.s32 8192, 8192
      %27 = vsyncadd [#allocation6], %s26
      %s28 = sshll.u32 [#allocation5], 4
      %s29 = int_to_ptr.vmem [resolvable:$true] %s28
      %34 = dma.hbm_to_vmem [thread:$0]  %s1, 8192, %s29, [#allocation6], 128, 128, 8
    $region9: #{tpu_custom_call.1} parent=1 // pred_fallthru
      _
    // Predicated region
    $region10: #{tpu_custom_call.1} parent=1 // pred_check
      _
    $region11: #{tpu_custom_call.1} parent=1 // pred_check_branch
      %36 = sbr.rel (0) target = $region13
    $region12: #{tpu_custom_call.1} parent=1 // pred_region
      %s38 = ssub.s32 4096, 4096
      %39 = vsyncadd [#allocation6], %s38
      %s40 = sshll.u32 [#allocation7], 4
      %s41 = int_to_ptr.vmem [resolvable:$true] %s40
      %46 = dma.hbm_to_vmem [thread:$0]  %s2, 4096, %s41, [#allocation6], 256, 256, 16
    $region13: #{tpu_custom_call.1} parent=1 // pred_fallthru
      _
    // Predicated region
    $region14: #{tpu_custom_call.1} parent=1 // pred_check
      _
    $region15: #{tpu_custom_call.1} parent=1 // pred_check_branch
      %48 = sbr.rel (0) target = $region17
    $region16: #{tpu_custom_call.1} parent=1 // pred_region
      %s50 = ssub.s32 128, 128
      %51 = vsyncadd [#allocation9], %s50
      %s53 = sshll.u32 [#allocation8], 4
      %s54 = int_to_ptr.vmem [resolvable:$true] %s53
      %56 = dma.hbm_to_vmem [thread:$0]  %s3, 128, %s54, [#allocation9]
    $region17: #{tpu_custom_call.1} parent=1 // pred_fallthru
      _
    // Predicated region
    $region18: #{tpu_custom_call.1} parent=1 // pred_check
      _
    $region19: #{tpu_custom_call.1} parent=1 // pred_check_branch
      %58 = sbr.rel (0) target = $region21
    $region20: #{tpu_custom_call.1} parent=1 // pred_region
      %59 = dma.done [#allocation3], 512
    $region21: #{tpu_custom_call.1} parent=1 // pred_fallthru
      _
    // Predicated region
    $region22: #{tpu_custom_call.1} parent=1 // pred_check
      _
    $region23: #{tpu_custom_call.1} parent=1 // pred_check_branch
      %61 = sbr.rel (0) target = $region25
    $region24: #{tpu_custom_call.1} parent=1 // pred_region
      %62 = dma.done [#allocation6], 8192
    $region25: #{tpu_custom_call.1} parent=1 // pred_fallthru
      _
    // Predicated region
    $region26: #{tpu_custom_call.1} parent=1 // pred_check
      _
    $region27: #{tpu_custom_call.1} parent=1 // pred_check_branch
      %64 = sbr.rel (0) target = $region29
    $region28: #{tpu_custom_call.1} parent=1 // pred_region
      %65 = dma.done [#allocation6], 4096
    $region29: #{tpu_custom_call.1} parent=1 // pred_fallthru
      _
    // Predicated region
    $region30: #{tpu_custom_call.1} parent=1 // pred_check
      _
    $region31: #{tpu_custom_call.1} parent=1 // pred_check_branch
      %67 = sbr.rel (0) target = $region33
    $region32: #{tpu_custom_call.1} parent=1 // pred_region
      %68 = dma.done [#allocation9], 128
    $region33: #{tpu_custom_call.1} parent=1 // pred_fallthru
      _
    %v69 = vld [vmem:[#allocation8] sm:$0xff]
    %v70 = vld [vmem:[#allocation2] sm:$0xff]
    %v71 = vld [vmem:[#allocation2 + $0x8] sm:$0xff]
    %v72 = vld [vmem:[#allocation2 + $0x10] sm:$0xff]
    %v73 = vld [vmem:[#allocation2 + $0x18] sm:$0xff]
    %v74 = vld [vmem:[#allocation5] sm:$0xff]
    %v75 = vld [vmem:[#allocation5 + $0x8] sm:$0xff]
    %v76 = vld [vmem:[#allocation5 + $0x10] sm:$0xff]
    %v77 = vld [vmem:[#allocation5 + $0x18] sm:$0xff]
    %v78 = vld [vmem:[#allocation5 + $0x20] sm:$0xff]
    %v79 = vld [vmem:[#allocation5 + $0x28] sm:$0xff]
    %v80 = vld [vmem:[#allocation5 + $0x30] sm:$0xff]
    %v81 = vld [vmem:[#allocation5 + $0x38] sm:$0xff]
    %v82 = vld [vmem:[#allocation5 + $0x40] sm:$0xff]
    %v83 = vld [vmem:[#allocation5 + $0x48] sm:$0xff]
    %v84 = vld [vmem:[#allocation5 + $0x50] sm:$0xff]
    %v85 = vld [vmem:[#allocation5 + $0x58] sm:$0xff]
    %v86 = vld [vmem:[#allocation5 + $0x60] sm:$0xff]
    %v87 = vld [vmem:[#allocation5 + $0x68] sm:$0xff]
    %v88 = vld [vmem:[#allocation5 + $0x70] sm:$0xff]
    %v89 = vld [vmem:[#allocation5 + $0x78] sm:$0xff]
    %v90 = vld [vmem:[#allocation5 + $0x80] sm:$0xff]
    %v91 = vld [vmem:[#allocation5 + $0x88] sm:$0xff]
    %v92 = vld [vmem:[#allocation5 + $0x90] sm:$0xff]
    %v93 = vld [vmem:[#allocation5 + $0x98] sm:$0xff]
    %v94 = vld [vmem:[#allocation5 + $0xa0] sm:$0xff]
    %v95 = vld [vmem:[#allocation5 + $0xa8] sm:$0xff]
    %v96 = vld [vmem:[#allocation5 + $0xb0] sm:$0xff]
    %v97 = vld [vmem:[#allocation5 + $0xb8] sm:$0xff]
    %v98 = vld [vmem:[#allocation5 + $0xc0] sm:$0xff]
    %v99 = vld [vmem:[#allocation5 + $0xc8] sm:$0xff]
    %v100 = vld [vmem:[#allocation5 + $0xd0] sm:$0xff]
    %v101 = vld [vmem:[#allocation5 + $0xd8] sm:$0xff]
    %v102 = vld [vmem:[#allocation5 + $0xe0] sm:$0xff]
    %v103 = vld [vmem:[#allocation5 + $0xe8] sm:$0xff]
    %v104 = vld [vmem:[#allocation5 + $0xf0] sm:$0xff]
    %v105 = vld [vmem:[#allocation5 + $0xf8] sm:$0xff]
    %v106 = vld [vmem:[#allocation5 + $0x100] sm:$0xff]
    %v107 = vld [vmem:[#allocation5 + $0x108] sm:$0xff]
    %v108 = vld [vmem:[#allocation5 + $0x110] sm:$0xff]
    %v109 = vld [vmem:[#allocation5 + $0x118] sm:$0xff]
    %v110 = vld [vmem:[#allocation5 + $0x120] sm:$0xff]
    %v111 = vld [vmem:[#allocation5 + $0x128] sm:$0xff]
    %v112 = vld [vmem:[#allocation5 + $0x130] sm:$0xff]
    %v113 = vld [vmem:[#allocation5 + $0x138] sm:$0xff]
    %v114 = vld [vmem:[#allocation5 + $0x140] sm:$0xff]
    %v115 = vld [vmem:[#allocation5 + $0x148] sm:$0xff]
    %v116 = vld [vmem:[#allocation5 + $0x150] sm:$0xff]
    %v117 = vld [vmem:[#allocation5 + $0x158] sm:$0xff]
    %v118 = vld [vmem:[#allocation5 + $0x160] sm:$0xff]
    %v119 = vld [vmem:[#allocation5 + $0x168] sm:$0xff]
    %v120 = vld [vmem:[#allocation5 + $0x170] sm:$0xff]
    %v121 = vld [vmem:[#allocation5 + $0x178] sm:$0xff]
    %v122 = vld [vmem:[#allocation5 + $0x180] sm:$0xff]
    %v123 = vld [vmem:[#allocation5 + $0x188] sm:$0xff]
    %v124 = vld [vmem:[#allocation5 + $0x190] sm:$0xff]
    %v125 = vld [vmem:[#allocation5 + $0x198] sm:$0xff]
    %v126 = vld [vmem:[#allocation5 + $0x1a0] sm:$0xff]
    %v127 = vld [vmem:[#allocation5 + $0x1a8] sm:$0xff]
    %v128 = vld [vmem:[#allocation5 + $0x1b0] sm:$0xff]
    %v129 = vld [vmem:[#allocation5 + $0x1b8] sm:$0xff]
    %v130 = vld [vmem:[#allocation5 + $0x1c0] sm:$0xff]
    %v131 = vld [vmem:[#allocation5 + $0x1c8] sm:$0xff]
    %v132 = vld [vmem:[#allocation5 + $0x1d0] sm:$0xff]
    %v133 = vld [vmem:[#allocation5 + $0x1d8] sm:$0xff]
    %v134 = vld [vmem:[#allocation5 + $0x1e0] sm:$0xff]
    %v135 = vld [vmem:[#allocation5 + $0x1e8] sm:$0xff]
    %v136 = vld [vmem:[#allocation5 + $0x1f0] sm:$0xff]
    %v137 = vld [vmem:[#allocation5 + $0x1f8] sm:$0xff]
    %138 = vmatprep.subr.mxu0 0.0
    %139 = vmatpush1.msra.mxu0 %v89
    %140 = vmatprep.subr.mxu0 0.0
    %141 = vmatpush1.msra.mxu0 %v88
    %142 = vmatprep.subr.mxu0 0.0
    %143 = vmatpush1.msra.mxu0 %v87
    %144 = vmatprep.subr.mxu0 0.0
    %145 = vmatpush1.msra.mxu0 %v86
    %146 = vmatprep.subr.mxu0 0.0
    %147 = vmatpush1.msra.mxu0 %v85
    %148 = vmatprep.subr.mxu0 0.0
    %149 = vmatpush1.msra.mxu0 %v84
    %150 = vmatprep.subr.mxu0 0.0
    %151 = vmatpush1.msra.mxu0 %v83
    %152 = vmatprep.subr.mxu0 0.0
    %153 = vmatpush1.msra.mxu0 %v82
    %154 = vmatprep.subr.mxu0 0.0
    %155 = vmatpush1.msra.mxu0 %v81
    %156 = vmatprep.subr.mxu0 0.0
    %157 = vmatpush1.msra.mxu0 %v80
    %158 = vmatprep.subr.mxu0 0.0
    %159 = vmatpush1.msra.mxu0 %v79
    %160 = vmatprep.subr.mxu0 0.0
    %161 = vmatpush1.msra.mxu0 %v78
    %162 = vmatprep.subr.mxu0 0.0
    %163 = vmatpush1.msra.mxu0 %v77
    %164 = vmatprep.subr.mxu0 0.0
    %165 = vmatpush1.msra.mxu0 %v76
    %166 = vmatprep.subr.mxu0 0.0
    %167 = vmatpush1.msra.mxu0 %v75
    %168 = vmatprep.subr.mxu0 0.0
    %169 = vmatpush1.msra.mxu0 %v74
    %170 = vmatprep.subr.mxu0 0.0
    %171 = vmatpush2.msra.mxu0 %v105
    %172 = vmatprep.subr.mxu0 0.0
    %173 = vmatpush2.msra.mxu0 %v104
    %174 = vmatprep.subr.mxu0 0.0
    %175 = vmatpush2.msra.mxu0 %v103
    %176 = vmatprep.subr.mxu0 0.0
    %177 = vmatpush2.msra.mxu0 %v102
    %178 = vmatprep.subr.mxu0 0.0
    %179 = vmatpush2.msra.mxu0 %v101
    %180 = vmatprep.subr.mxu0 0.0
    %181 = vmatpush2.msra.mxu0 %v100
    %182 = vmatprep.subr.mxu0 0.0
    %183 = vmatpush2.msra.mxu0 %v99
    %184 = vmatprep.subr.mxu0 0.0
    %185 = vmatpush2.msra.mxu0 %v98
    %186 = vmatprep.subr.mxu0 0.0
    %187 = vmatpush2.msra.mxu0 %v97
    %188 = vmatprep.subr.mxu0 0.0
    %189 = vmatpush2.msra.mxu0 %v96
    %190 = vmatprep.subr.mxu0 0.0
    %191 = vmatpush2.msra.mxu0 %v95
    %192 = vmatprep.subr.mxu0 0.0
    %193 = vmatpush2.msra.mxu0 %v94
    %194 = vmatprep.subr.mxu0 0.0
    %195 = vmatpush2.msra.mxu0 %v93
    %196 = vmatprep.subr.mxu0 0.0
    %197 = vmatpush2.msra.mxu0 %v92
    %198 = vmatprep.subr.mxu0 0.0
    %199 = vmatpush2.msra.mxu0 %v91
    %200 = vmatprep.subr.mxu0 0.0
    %201 = vmatpush2.msra.mxu0 %v90
    %202 = vmatprep.mubr.f32.mxu0 %v71
    %203 = vmatmul.mubr.f32.gmra.mxu0 %v70
    %v204 = vpop.f32.mrf.mxu0
    %v205 = vadd.f32 0.0, %v204
    %v206 = vpop.f32.mrf.mxu0
    %207 = vdwg.mxu0
    %208 = vmatprep.subr.mxu0 0.0
    %209 = vmatpush1.msra.mxu0 %v121
    %210 = vmatprep.subr.mxu0 0.0
    %211 = vmatpush1.msra.mxu0 %v120
    %212 = vmatprep.subr.mxu0 0.0
    %213 = vmatpush1.msra.mxu0 %v119
    %214 = vmatprep.subr.mxu0 0.0
    %215 = vmatpush1.msra.mxu0 %v118
    %216 = vmatprep.subr.mxu0 0.0
    %217 = vmatpush1.msra.mxu0 %v117
    %218 = vmatprep.subr.mxu0 0.0
    %219 = vmatpush1.msra.mxu0 %v116
    %220 = vmatprep.subr.mxu0 0.0
    %221 = vmatpush1.msra.mxu0 %v115
    %222 = vmatprep.subr.mxu0 0.0
    %223 = vmatpush1.msra.mxu0 %v114
    %224 = vmatprep.subr.mxu0 0.0
    %225 = vmatpush1.msra.mxu0 %v113
    %226 = vmatprep.subr.mxu0 0.0
    %227 = vmatpush1.msra.mxu0 %v112
    %228 = vmatprep.subr.mxu0 0.0
    %229 = vmatpush1.msra.mxu0 %v111
    %230 = vmatprep.subr.mxu0 0.0
    %231 = vmatpush1.msra.mxu0 %v110
    %232 = vmatprep.subr.mxu0 0.0
    %233 = vmatpush1.msra.mxu0 %v109
    %234 = vmatprep.subr.mxu0 0.0
    %235 = vmatpush1.msra.mxu0 %v108
    %236 = vmatprep.subr.mxu0 0.0
    %237 = vmatpush1.msra.mxu0 %v107
    %238 = vmatprep.subr.mxu0 0.0
    %239 = vmatpush1.msra.mxu0 %v106
    %240 = vmatprep.subr.mxu0 0.0
    %241 = vmatpush2.msra.mxu0 %v137
    %242 = vmatprep.subr.mxu0 0.0
    %243 = vmatpush2.msra.mxu0 %v136
    %244 = vmatprep.subr.mxu0 0.0
    %245 = vmatpush2.msra.mxu0 %v135
    %246 = vmatprep.subr.mxu0 0.0
    %247 = vmatpush2.msra.mxu0 %v134
    %248 = vmatprep.subr.mxu0 0.0
    %249 = vmatpush2.msra.mxu0 %v133
    %250 = vmatprep.subr.mxu0 0.0
    %251 = vmatpush2.msra.mxu0 %v132
    %252 = vmatprep.subr.mxu0 0.0
    %253 = vmatpush2.msra.mxu0 %v131
    %254 = vmatprep.subr.mxu0 0.0
    %255 = vmatpush2.msra.mxu0 %v130
    %256 = vmatprep.subr.mxu0 0.0
    %257 = vmatpush2.msra.mxu0 %v129
    %258 = vmatprep.subr.mxu0 0.0
    %259 = vmatpush2.msra.mxu0 %v128
    %260 = vmatprep.subr.mxu0 0.0
    %261 = vmatpush2.msra.mxu0 %v127
    %262 = vmatprep.subr.mxu0 0.0
    %263 = vmatpush2.msra.mxu0 %v126
    %264 = vmatprep.subr.mxu0 0.0
    %265 = vmatpush2.msra.mxu0 %v125
    %266 = vmatprep.subr.mxu0 0.0
    %267 = vmatpush2.msra.mxu0 %v124
    %268 = vmatprep.subr.mxu0 0.0
    %269 = vmatpush2.msra.mxu0 %v123
    %270 = vmatprep.subr.mxu0 0.0
    %271 = vmatpush2.msra.mxu0 %v122
    %272 = vmatprep.mubr.f32.mxu0 %v73
    %273 = vmatmul.mubr.f32.gmra.mxu0 %v72
    %v274 = vpop.f32.mrf.mxu0
    %v275 = vadd.f32 %v205, %v274
    %v276 = vpop.f32.mrf.mxu0
    %277 = vdwg.mxu0
    %v278 = vrot.slane %v275, 4
    %v279 = vadd.f32 %v275, %v278
    %v280 = vrot.slane %v279, 2
    %v281 = vadd.f32 %v279, %v280
    %v282 = vrot.slane %v281, 1
    %v283 = vadd.f32 %v281, %v282
    %v284 = vrcp.pop 8.0
    %v285 = vmul.f32 %v283, %v284
    %v286 = vsub.f32 %v275, %v285
    %v287 = vmul.f32 %v286, %v286
    %v288 = vrot.slane %v287, 4
    %v289 = vadd.f32 %v287, %v288
    %v290 = vrot.slane %v289, 2
    %v291 = vadd.f32 %v289, %v290
    %v292 = vrot.slane %v291, 1
    %v293 = vadd.f32 %v291, %v292
    %v294 = vmul.f32 %v293, %v284
    %v295 = vadd.f32 %v294, 1e-05
    %v296 = vrsqrt.pop %v295
    %v297 = vmul.f32 %v69, %v296
    %v298 = vlaneseq
    %v299 = vshrl.u32 %v298, 7
    %v300 = vsub.s32 0, %v299
    %v301 = vrot.slane %v297, %v300
    %v302 = vmul.f32 %v286, %v301
    %v303 = vlaneseq
    %v304 = vshrl.u32 %v303, 7
    %v305 = vsub.s32 1, %v304
    %v306 = vrot.slane %v69, %v305
    %v307 = vadd.f32 %v302, %v306
    %vm308 = vcmp.gt.f32.partialorder %v307, 0.0
    %v309 = vmul.f32 %v307, 1.442695
    %v310 = vpow.pop %v309
    %v311 = vsub.f32 %v310, 1.0
    %v312 = vsel %vm308, %v307, %v311
    %v313 = vld [vmem:[#allocation7] sm:$0xff]
    %v314 = vld [vmem:[#allocation7 + $0x10] sm:$0xff]
    %v315 = vld [vmem:[#allocation7 + $0x20] sm:$0xff]
    %v316 = vld [vmem:[#allocation7 + $0x30] sm:$0xff]
    %v317 = vld [vmem:[#allocation7 + $0x40] sm:$0xff]
    %v318 = vld [vmem:[#allocation7 + $0x50] sm:$0xff]
    %v319 = vld [vmem:[#allocation7 + $0x60] sm:$0xff]
    %v320 = vld [vmem:[#allocation7 + $0x70] sm:$0xff]
    %v321 = vld [vmem:[#allocation7 + $0x80] sm:$0xff]
    %v322 = vld [vmem:[#allocation7 + $0x90] sm:$0xff]
    %v323 = vld [vmem:[#allocation7 + $0xa0] sm:$0xff]
    %v324 = vld [vmem:[#allocation7 + $0xb0] sm:$0xff]
    %v325 = vld [vmem:[#allocation7 + $0xc0] sm:$0xff]
    %v326 = vld [vmem:[#allocation7 + $0xd0] sm:$0xff]
    %v327 = vld [vmem:[#allocation7 + $0xe0] sm:$0xff]
    %v328 = vld [vmem:[#allocation7 + $0xf0] sm:$0xff]
    %329 = vmatprep.subr.mxu0 0.0
    %330 = vmatpush1.msra.mxu0 %v328
    %331 = vmatprep.subr.mxu0 0.0
    %332 = vmatpush1.msra.mxu0 %v327
    %333 = vmatprep.subr.mxu0 0.0
    %334 = vmatpush1.msra.mxu0 %v326
    %335 = vmatprep.subr.mxu0 0.0
    %336 = vmatpush1.msra.mxu0 %v325
    %337 = vmatprep.subr.mxu0 0.0
    %338 = vmatpush1.msra.mxu0 %v324
    %339 = vmatprep.subr.mxu0 0.0
    %340 = vmatpush1.msra.mxu0 %v323
    %341 = vmatprep.subr.mxu0 0.0
    %342 = vmatpush1.msra.mxu0 %v322
    %343 = vmatprep.subr.mxu0 0.0
    %344 = vmatpush1.msra.mxu0 %v321
    %345 = vmatprep.subr.mxu0 0.0
    %346 = vmatpush1.msra.mxu0 %v320
    %347 = vmatprep.subr.mxu0 0.0
    %348 = vmatpush1.msra.mxu0 %v319
    %349 = vmatprep.subr.mxu0 0.0
    %350 = vmatpush1.msra.mxu0 %v318
    %351 = vmatprep.subr.mxu0 0.0
    %352 = vmatpush1.msra.mxu0 %v317
    %353 = vmatprep.subr.mxu0 0.0
    %354 = vmatpush1.msra.mxu0 %v316
    %355 = vmatprep.subr.mxu0 0.0
    %356 = vmatpush1.msra.mxu0 %v315
    %357 = vmatprep.subr.mxu0 0.0
    %358 = vmatpush1.msra.mxu0 %v314
    %359 = vmatprep.subr.mxu0 0.0
    %360 = vmatpush1.msra.mxu0 %v313
    %361 = vmatprep.subr.mxu0 0.0
    %362 = vmatpush2.msra.mxu0 0.0
    %363 = vmatprep.subr.mxu0 0.0
    %364 = vmatpush2.msra.mxu0 0.0
    %365 = vmatprep.subr.mxu0 0.0
    %366 = vmatpush2.msra.mxu0 0.0
    %367 = vmatprep.subr.mxu0 0.0
    %368 = vmatpush2.msra.mxu0 0.0
    %369 = vmatprep.subr.mxu0 0.0
    %370 = vmatpush2.msra.mxu0 0.0
    %371 = vmatprep.subr.mxu0 0.0
    %372 = vmatpush2.msra.mxu0 0.0
    %373 = vmatprep.subr.mxu0 0.0
    %374 = vmatpush2.msra.mxu0 0.0
    %375 = vmatprep.subr.mxu0 0.0
    %376 = vmatpush2.msra.mxu0 0.0
    %377 = vmatprep.subr.mxu0 0.0
    %378 = vmatpush2.msra.mxu0 0.0
    %379 = vmatprep.subr.mxu0 0.0
    %380 = vmatpush2.msra.mxu0 0.0
    %381 = vmatprep.subr.mxu0 0.0
    %382 = vmatpush2.msra.mxu0 0.0
    %383 = vmatprep.subr.mxu0 0.0
    %384 = vmatpush2.msra.mxu0 0.0
    %385 = vmatprep.subr.mxu0 0.0
    %386 = vmatpush2.msra.mxu0 0.0
    %387 = vmatprep.subr.mxu0 0.0
    %388 = vmatpush2.msra.mxu0 0.0
    %389 = vmatprep.subr.mxu0 0.0
    %390 = vmatpush2.msra.mxu0 0.0
    %391 = vmatprep.subr.mxu0 0.0
    %392 = vmatpush2.msra.mxu0 0.0
    %393 = vmatprep.mubr.f32.mxu0 0.0
    %394 = vmatmul.mubr.f32.gmra.mxu0 %v312
    %v395 = vpop.f32.mrf.mxu0
    %v396 = vadd.f32 0.0, %v395
    %v397 = vpop.f32.mrf.mxu0
    %398 = vdwg.mxu0
    %v399 = vrot.slane %v396, 4
    %v400 = vadd.f32 %v396, %v399
    %v401 = vrot.slane %v400, 2
    %v402 = vadd.f32 %v400, %v401
    %v403 = vrot.slane %v402, 1
    %v404 = vadd.f32 %v402, %v403
    %v405 = vmul.f32 %v404, %v284
    %v406 = vsub.f32 %v396, %v405
    %v407 = vmul.f32 %v406, %v406
    %v408 = vrot.slane %v407, 4
    %v409 = vadd.f32 %v407, %v408
    %v410 = vrot.slane %v409, 2
    %v411 = vadd.f32 %v409, %v410
    %v412 = vrot.slane %v411, 1
    %v413 = vadd.f32 %v411, %v412
    %v414 = vmul.f32 %v413, %v284
    %v415 = vadd.f32 %v414, 1e-05
    %v416 = vrsqrt.pop %v415
    %v417 = vmul.f32 %v69, %v416
    %v418 = vlaneseq
    %v419 = vshrl.u32 %v418, 7
    %v420 = vsub.s32 2, %v419
    %v421 = vrot.slane %v417, %v420
    %v422 = vmul.f32 %v406, %v421
    %v423 = vlaneseq
    %v424 = vshrl.u32 %v423, 7
    %v425 = vsub.s32 3, %v424
    %v426 = vrot.slane %v69, %v425
    %v427 = vadd.f32 %v422, %v426
    %vm428 = vcmp.gt.f32.partialorder %v427, 0.0
    %v429 = vmul.f32 %v427, 1.442695
    %v430 = vpow.pop %v429
    %v431 = vsub.f32 %v430, 1.0
    %v432 = vsel %vm428, %v427, %v431
    %v433 = vld [vmem:[#allocation7 + $0x8] sm:$0xff]
    %v434 = vld [vmem:[#allocation7 + $0x18] sm:$0xff]
    %v435 = vld [vmem:[#allocation7 + $0x28] sm:$0xff]
    %v436 = vld [vmem:[#allocation7 + $0x38] sm:$0xff]
    %v437 = vld [vmem:[#allocation7 + $0x48] sm:$0xff]
    %v438 = vld [vmem:[#allocation7 + $0x58] sm:$0xff]
    %v439 = vld [vmem:[#allocation7 + $0x68] sm:$0xff]
    %v440 = vld [vmem:[#allocation7 + $0x78] sm:$0xff]
    %v441 = vld [vmem:[#allocation7 + $0x88] sm:$0xff]
    %v442 = vld [vmem:[#allocation7 + $0x98] sm:$0xff]
    %v443 = vld [vmem:[#allocation7 + $0xa8] sm:$0xff]
    %v444 = vld [vmem:[#allocation7 + $0xb8] sm:$0xff]
    %v445 = vld [vmem:[#allocation7 + $0xc8] sm:$0xff]
    %v446 = vld [vmem:[#allocation7 + $0xd8] sm:$0xff]
    %v447 = vld [vmem:[#allocation7 + $0xe8] sm:$0xff]
    %v448 = vld [vmem:[#allocation7 + $0xf8] sm:$0xff]
    %v449 = vlaneseq
    %v450 = vshrl.u32 %v449, 7
    %v451 = vsub.s32 4, %v450
    %v452 = vrot.slane %v69, %v451
    %453 = vmatprep.subr.mxu0 0.0
    %454 = vmatpush1.msra.mxu0 %v448
    %455 = vmatprep.subr.mxu0 0.0
    %456 = vmatpush1.msra.mxu0 %v447
    %457 = vmatprep.subr.mxu0 0.0
    %458 = vmatpush1.msra.mxu0 %v446
    %459 = vmatprep.subr.mxu0 0.0
    %460 = vmatpush1.msra.mxu0 %v445
    %461 = vmatprep.subr.mxu0 0.0
    %462 = vmatpush1.msra.mxu0 %v444
    %463 = vmatprep.subr.mxu0 0.0
    %464 = vmatpush1.msra.mxu0 %v443
    %465 = vmatprep.subr.mxu0 0.0
    %466 = vmatpush1.msra.mxu0 %v442
    %467 = vmatprep.subr.mxu0 0.0
    %468 = vmatpush1.msra.mxu0 %v441
    %469 = vmatprep.subr.mxu0 0.0
    %470 = vmatpush1.msra.mxu0 %v440
    %471 = vmatprep.subr.mxu0 0.0
    %472 = vmatpush1.msra.mxu0 %v439
    %473 = vmatprep.subr.mxu0 0.0
    %474 = vmatpush1.msra.mxu0 %v438
    %475 = vmatprep.subr.mxu0 0.0
    %476 = vmatpush1.msra.mxu0 %v437
    %477 = vmatprep.subr.mxu0 0.0
    %478 = vmatpush1.msra.mxu0 %v436
    %479 = vmatprep.subr.mxu0 0.0
    %480 = vmatpush1.msra.mxu0 %v435
    %481 = vmatprep.subr.mxu0 0.0
    %482 = vmatpush1.msra.mxu0 %v434
    %483 = vmatprep.subr.mxu0 0.0
    %484 = vmatpush1.msra.mxu0 %v433
    %485 = vmatprep.subr.mxu0 0.0
    %486 = vmatpush2.msra.mxu0 0.0
    %487 = vmatprep.subr.mxu0 0.0
    %488 = vmatpush2.msra.mxu0 0.0
    %489 = vmatprep.subr.mxu0 0.0
    %490 = vmatpush2.msra.mxu0 0.0
    %491 = vmatprep.subr.mxu0 0.0
    %492 = vmatpush2.msra.mxu0 0.0
    %493 = vmatprep.subr.mxu0 0.0
    %494 = vmatpush2.msra.mxu0 0.0
    %495 = vmatprep.subr.mxu0 0.0
    %496 = vmatpush2.msra.mxu0 0.0
    %497 = vmatprep.subr.mxu0 0.0
    %498 = vmatpush2.msra.mxu0 0.0
    %499 = vmatprep.subr.mxu0 0.0
    %500 = vmatpush2.msra.mxu0 0.0
    %501 = vmatprep.subr.mxu0 0.0
    %502 = vmatpush2.msra.mxu0 0.0
    %503 = vmatprep.subr.mxu0 0.0
    %504 = vmatpush2.msra.mxu0 0.0
    %505 = vmatprep.subr.mxu0 0.0
    %506 = vmatpush2.msra.mxu0 0.0
    %507 = vmatprep.subr.mxu0 0.0
    %508 = vmatpush2.msra.mxu0 0.0
    %509 = vmatprep.subr.mxu0 0.0
    %510 = vmatpush2.msra.mxu0 0.0
    %511 = vmatprep.subr.mxu0 0.0
    %512 = vmatpush2.msra.mxu0 0.0
    %513 = vmatprep.subr.mxu0 0.0
    %514 = vmatpush2.msra.mxu0 0.0
    %515 = vmatprep.subr.mxu0 0.0
    %516 = vmatpush2.msra.mxu0 0.0
    %517 = vmatprep.mubr.f32.mxu0 0.0
    %518 = vmatmul.mubr.f32.gmra.mxu0 %v432
    %v519 = vpop.f32.mrf.mxu0
    %v520 = vadd.f32 %v452, %v519
    %v521 = vpop.f32.mrf.mxu0
    %522 = vdwg.mxu0
    %523 = vst [vmem:[#allocation10] sm:$0xff] %v520
    // Predicated region
    $region34: #{tpu_custom_call.1} parent=1 // pred_check
      _
    $region35: #{tpu_custom_call.1} parent=1 // pred_check_branch
      %525 = sbr.rel (0) target = $region37
    $region36: #{tpu_custom_call.1} parent=1 // pred_region
      %s527 = ssub.s32 128, 128
      %528 = vsyncadd [#allocation4], %s527
      %s530 = sshll.u32 [#allocation10], 4
      %s531 = int_to_ptr.vmem [resolvable:$true] %s530
      %533 = dma.vmem_to_hbm [thread:$0]  %s531, 128, %s4, [#allocation4]
    $region37: #{tpu_custom_call.1} parent=1 // pred_fallthru
      _
    // Predicated region
    $region38: #{tpu_custom_call.1} parent=1 // pred_check
      _
    $region39: #{tpu_custom_call.1} parent=1 // pred_check_branch
      %535 = sbr.rel (0) target = $region41
    $region40: #{tpu_custom_call.1} parent=1 // pred_region
      %536 = dma.done [#allocation4], 128
    $region41: #{tpu_custom_call.1} parent=1 // pred_fallthru
      _
    %537 = vsyncpa [#allocation3], 1
    %538 = vsyncpa [#allocation6], 1
    %539 = vsyncpa [#allocation9], 1
    %540 = vsyncpa [#allocation4], 1

</llo_original>
